<compile_context>
chip_gen: v7x
topology: tpu7x:2x2x1
jax: 0.10.0
libtpu: 0.0.40
codegen_flags: <defaults>
</compile_context>

<pallas_src>
import jax
import jax.numpy as jnp
from jax.experimental import pallas as pl
from jax.experimental.pallas import tpu as pltpu


def layer_scale_kernel(x_ref, s_ref, o_ref):
    # Pure VPU elementwise multiply. s_ref is either a (tile_rows, 1) per-row column
    # (lane broadcast) or a resident (1, row_len) row (sublane broadcast).
    o_ref[...] = x_ref[...].astype(o_ref.dtype) * s_ref[...]


def _sublane_multiple(*dtypes):
    # Sub-32-bit dtypes pack along sublanes: minimum sublane tiling is 8 (4-byte),
    # 16 (2-byte), 32 (1-byte).
    m = 8
    for dt in dtypes:
        m = max(m, 32 // max(1, jnp.dtype(dt).itemsize))
    return m


def _pick_tile_rows(total_rows, per_row_pipeline_bytes, sublane,
                    vmem_budget_bytes, max_rows=4096, min_steps=4):
    """Row tile: as large as fits the double-buffered VMEM budget, a multiple of the
    dtype's sublane tiling, and capped so the grid has >= min_steps steps when rows
    allow (v7x 2-TC megacore sharding + prefetch/writeback overlap)."""
    if total_rows <= sublane:
        return total_rows  # full extent — exempt from the (sublane, 128) rule
    tile = min(max_rows, (total_rows // sublane) * sublane)
    tile = max(tile, sublane)
    while tile > sublane and tile * per_row_pipeline_bytes > vmem_budget_bytes:
        tile = max(sublane, ((tile // 2) // sublane) * sublane)
    steps = max(1, min(min_steps, total_rows // sublane))
    cap = max(sublane, (pl.cdiv(total_rows, steps) // sublane) * sublane)
    return min(tile, cap)


_VMEM_LIMIT_BYTES = 24 << 20   # explicit scoped-VMEM limit: safe on v5e/v6e (128 MiB
                               # physical) and v7x (64 MiB physical, 32 MiB default)
_DEFAULT_BUDGET_BYTES = 12 << 20  # target double-buffered in+out+scale footprint


def layer_scale(x, layer_scale_param, *, small_input_bytes=1 << 18,
                vmem_budget_bytes=_DEFAULT_BUDGET_BYTES, in_place=False):
    """LayerScale forward: x (N, C, H, W) * layer_scale_param (1, C, 1, 1)."""
    N, C, H, W = x.shape
    assert layer_scale_param.shape == (1, C, 1, 1)

    out_dtype = jnp.result_type(x.dtype, layer_scale_param.dtype)
    x_item = jnp.dtype(x.dtype).itemsize
    out_item = jnp.dtype(out_dtype).itemsize
    hw = H * W
    rows = N * C

    # Tiny inputs: a standalone kernel call is pure overhead; let XLA fuse the multiply.
    if x.size * x_item < small_input_bytes:
        return x * layer_scale_param

    scale_c = layer_scale_param.reshape(C).astype(out_dtype)
    sublane = _sublane_multiple(x.dtype, out_dtype)

    if hw % 128 == 0:
        # Lane-dense view: one (n, c) plane per row; per-row scale column (lane splat).
        view_rows, view_cols = rows, hw
        x2 = x.reshape(view_rows, view_cols)
        s2 = jnp.broadcast_to(scale_c[None, :], (N, C)).reshape(view_rows, 1)
        # Double-buffered per-row footprint: in + out tiles plus the (tile_rows, 1)
        # scale block, which pads to 128 lanes in VMEM.
        per_row = 2 * (view_cols * (x_item + out_item) + 128 * out_item)
        resident_bytes = 0
        s_is_column = True
    else:
        # Non-128-aligned H*W: flatten to (N, C*H*W) so the last block dim is the full
        # extent -> unmasked stores, no lane padding. The scale is a pre-broadcast
        # (1, C*H*W) row kept VMEM-resident via a constant index_map.
        view_rows, view_cols = N, C * hw
        x2 = x.reshape(view_rows, view_cols)
        s2 = jnp.broadcast_to(scale_c[:, None], (C, hw)).reshape(1, view_cols)
        per_row = 2 * view_cols * (x_item + out_item)
        resident_bytes = view_cols * out_item
        s_is_column = False

    # If even the minimal block would blow the VMEM limit (absurd spatial sizes),
    # punt to the XLA fusion instead of risking an OOM.
    if min(view_rows, sublane) * per_row + resident_bytes > _VMEM_LIMIT_BYTES:
        return x * layer_scale_param

    tile_rows = _pick_tile_rows(
        view_rows, per_row, sublane,
        max(1, vmem_budget_bytes - resident_bytes))

    if s_is_column:
        s_block, s_map = (tile_rows, 1), (lambda i: (i, 0))
    else:
        s_block, s_map = (1, view_cols), (lambda i: (0, 0))

    grid = (pl.cdiv(view_rows, tile_rows),)
    aliases = {0: 0} if (in_place and x.dtype == out_dtype) else {}

    out2 = pl.pallas_call(
        layer_scale_kernel,
        out_shape=jax.ShapeDtypeStruct((view_rows, view_cols), out_dtype),
        grid=grid,
        in_specs=[
            pl.BlockSpec((tile_rows, view_cols), lambda i: (i, 0)),
            pl.BlockSpec(s_block, s_map),
        ],
        out_specs=pl.BlockSpec((tile_rows, view_cols), lambda i: (i, 0)),
        compiler_params=pltpu.CompilerParams(
            dimension_semantics=("parallel",),
            vmem_limit_bytes=_VMEM_LIMIT_BYTES,
        ),
        input_output_aliases=aliases,
    )(x2, s2)

    return out2.reshape(N, C, H, W)


if __name__ == "__main__":
    # Module config: dim = C, init_value = 0.01 (deterministic init, as in __init__).
    N, C, H, W = 2, 4, 16, 16
    init_value = 0.01

    key = jax.random.PRNGKey(0)
    x = jax.random.normal(key, (N, C, H, W), dtype=jnp.float32)
    scale = init_value * jnp.ones((1, C, 1, 1), dtype=jnp.float32)

    # Force the Pallas path even at this tiny demo size (default dispatch would
    # short-circuit sub-256 KiB inputs to plain JAX).
    out = jax.block_until_ready(layer_scale(x, scale, small_input_bytes=0))
    ref = x * scale
    assert out.shape == ref.shape and out.dtype == ref.dtype
    assert jnp.allclose(out, ref, atol=1e-6, rtol=1e-6)

    # Non-128-aligned H*W path (7x7 feature map) through the kernel.
    x_odd = jax.random.normal(jax.random.PRNGKey(0), (2, 4, 7, 7), dtype=jnp.float32)
    out_odd = jax.block_until_ready(layer_scale(x_odd, scale, small_input_bytes=0))
    assert jnp.allclose(out_odd, x_odd * scale, atol=1e-6, rtol=1e-6)

    # Mixed precision: bf16 activations with f32 gamma promote to f32 (PyTorch-style).
    x_bf16 = x.astype(jnp.bfloat16)
    out_mp = jax.block_until_ready(layer_scale(x_bf16, scale, small_input_bytes=0))
    ref_mp = x_bf16 * scale
    assert out_mp.dtype == ref_mp.dtype == jnp.float32
    assert jnp.allclose(out_mp, ref_mp, atol=1e-6, rtol=1e-6)

    # Default dispatch (tiny input -> plain-JAX shortcut) stays correct too.
    out_default = jax.block_until_ready(layer_scale(x, scale))
    assert jnp.allclose(out_default, ref, atol=1e-6, rtol=1e-6)

    print("KERNEL_OK")
</pallas_src>

<mosaic_0001>
module attributes {stable_mosaic.version = 11 : i64} {
  func.func @layer_scale_kernel(%arg0: i32, %arg1: memref<8x256xf32, #tpu.memory_space<vmem>>, %arg2: memref<8x1xf32, #tpu.memory_space<vmem>>, %arg3: memref<8x256xf32, #tpu.memory_space<vmem>>) attributes {dimension_semantics = [#tpu.dimension_semantics<parallel>], iteration_bounds = array<i64: 1>, scalar_prefetch = 0 : i64, scratch_operands = 0 : i64, tpu.core_type = #tpu.core_type<tc>, window_params = [{transform_indices = @transform_0, window_bounds = array<i64: 8, 256>}, {transform_indices = @transform_1, window_bounds = array<i64: 8, 1>}, {transform_indices = @transform_2, window_bounds = array<i64: 8, 256>}]} {
    %c0 = arith.constant 0 : index
    %c0_0 = arith.constant 0 : index
    %0 = vector.load %arg1[%c0, %c0_0] : memref<8x256xf32, #tpu.memory_space<vmem>>, vector<8x256xf32>
    %c0_1 = arith.constant 0 : index
    %c0_2 = arith.constant 0 : index
    %1 = vector.load %arg2[%c0_1, %c0_2] : memref<8x1xf32, #tpu.memory_space<vmem>>, vector<8x1xf32>
    %2 = vector.broadcast %1 : vector<8x1xf32> to vector<8x256xf32>
    %3 = arith.mulf %0, %2 : vector<8x256xf32>
    %c0_3 = arith.constant 0 : index
    %c0_4 = arith.constant 0 : index
    %4 = vector.load %arg3[%c0_3, %c0_4] : memref<8x256xf32, #tpu.memory_space<vmem>>, vector<8x256xf32>
    tpu.vector_store %arg3[%c0_3, %c0_4], %3 {strides = array<i32>} : memref<8x256xf32, #tpu.memory_space<vmem>>, vector<8x256xf32>,
    return
  }
  func.func @transform_0(%arg0: i32) -> (i32, i32) {
    %c0_i32 = arith.constant 0 : i32
    %c0_i32_0 = arith.constant 0 : i32
    return %arg0, %c0_i32 : i32, i32
  }
  func.func @transform_1(%arg0: i32) -> (i32, i32) {
    %c0_i32 = arith.constant 0 : i32
    %c0_i32_0 = arith.constant 0 : i32
    return %arg0, %c0_i32 : i32, i32
  }
  func.func @transform_2(%arg0: i32) -> (i32, i32) {
    %c0_i32 = arith.constant 0 : i32
    %c0_i32_0 = arith.constant 0 : i32
    return %arg0, %c0_i32 : i32, i32
  }
}

</mosaic_0001>

<llo_original>
// kernel: tpu_custom_call.1
$region0: #{tpu_custom_call.1}
  #allocation0 [shape = 'u32[]', space=smem, size = 0x4, offset = 0x4, fixed_abs, tag = 'smem constant byte address 0x4 - core index']
  #allocation1 [shape = 'u32[144,128]{1,0:T(1,128)}', space=vmem, size = 0x12000, scoped, tag = 'internal scratch']
  %s0 = inlined_call_operand.hbm [shape: f32[8,256], index: 0, kind: input, shape index: {}]
  %s1 = inlined_call_operand.vmem [shape: f32[8,1], index: 1, kind: input, shape index: {}]
  %s2 = inlined_call_operand.hbm [shape: f32[8,256], index: 2, kind: output, shape index: {}]
  %s3 = sld [smem:[#allocation0]]
  $region22: #{tpu_custom_call.1} parent=0
    _
  %s5 = ssub.s32 1, %s3
  %s6 = scalar_select 0, %s5, %s3
  $region1: #{tpu_custom_call.1} parent=0
    #allocation2 [shape = 'u8[8192]{0}', space=vmem, size = 0x2000, scoped, tag = 'input window, operand 0, single buffered']
    #allocation3 [shape = 's32[1]{0}', space=sflag, size = 0x4, scoped, tag = 'scoped memory for tpu_custom_call.1']
    #allocation4 [shape = 's32[1]{0}', space=sflag, size = 0x4, scoped, tag = 'scoped memory for tpu_custom_call.1']
    #allocation5 [shape = 'u8[8192]{0}', space=vmem, size = 0x2000, scoped, tag = 'output window, operand 0, single buffered']
    %7 = vsyncpa [#allocation3], 0
    %8 = vsyncpa [#allocation4], 0
    // Predicated region
    $region2: #{tpu_custom_call.1} parent=1 // pred_check
      _
    $region3: #{tpu_custom_call.1} parent=1 // pred_check_branch
      %10 = sbr.rel (0) target = $region5
    $region4: #{tpu_custom_call.1} parent=1 // pred_region
      %s12 = ssub.s32 256, 256
      %13 = vsyncadd [#allocation3], %s12
      %s15 = sshll.u32 [#allocation2], 4
      %s16 = int_to_ptr.vmem [resolvable:$true] %s15
      %18 = dma.hbm_to_vmem [thread:$0]  %s0, 256, %s16, [#allocation3]
    $region5: #{tpu_custom_call.1} parent=1 // pred_fallthru
      _
    // Predicated region
    $region6: #{tpu_custom_call.1} parent=1 // pred_check
      _
    $region7: #{tpu_custom_call.1} parent=1 // pred_check_branch
      %20 = sbr.rel (0) target = $region9
    $region8: #{tpu_custom_call.1} parent=1 // pred_region
      _
    $region9: #{tpu_custom_call.1} parent=1 // pred_fallthru
      _
    // Predicated region
    $region10: #{tpu_custom_call.1} parent=1 // pred_check
      _
    $region11: #{tpu_custom_call.1} parent=1 // pred_check_branch
      %22 = sbr.rel (0) target = $region13
    $region12: #{tpu_custom_call.1} parent=1 // pred_region
      %23 = dma.done [#allocation3], 256
    $region13: #{tpu_custom_call.1} parent=1 // pred_fallthru
      _
    %v24 = vld [vmem:[#allocation2] sm:$0xff]
    %v25 = vld [vmem:[#allocation2 + $0x8] sm:$0xff]
    %v26 = vld [vmem:[%s1] sm:$0xff]
    %28 = vset.pattern.permute.xlu0 0
    %29 = vperm.xlu0 %28, %v26
    %v30 = vpop.permute.xlu0 %29
    %v32 = vmul.f32 %v24, %v30
    %v33 = vmul.f32 %v25, %v30
    %34 = vst [vmem:[#allocation5] sm:$0xff] %v32
    %35 = vst [vmem:[#allocation5 + $0x8] sm:$0xff] %v33
    // Predicated region
    $region14: #{tpu_custom_call.1} parent=1 // pred_check
      _
    $region15: #{tpu_custom_call.1} parent=1 // pred_check_branch
      %37 = sbr.rel (0) target = $region17
    $region16: #{tpu_custom_call.1} parent=1 // pred_region
      %s39 = ssub.s32 256, 256
      %40 = vsyncadd [#allocation4], %s39
      %s42 = sshll.u32 [#allocation5], 4
      %s43 = int_to_ptr.vmem [resolvable:$true] %s42
      %45 = dma.vmem_to_hbm [thread:$0]  %s43, 256, %s2, [#allocation4]
    $region17: #{tpu_custom_call.1} parent=1 // pred_fallthru
      _
    // Predicated region
    $region18: #{tpu_custom_call.1} parent=1 // pred_check
      _
    $region19: #{tpu_custom_call.1} parent=1 // pred_check_branch
      %47 = sbr.rel (0) target = $region21
    $region20: #{tpu_custom_call.1} parent=1 // pred_region
      %48 = dma.done [#allocation4], 256
    $region21: #{tpu_custom_call.1} parent=1 // pred_fallthru
      _
    %49 = vsyncpa [#allocation3], 1
    %50 = vsyncpa [#allocation4], 1

</llo_original>
